<compile_context>
chip_gen: v7x
topology: tpu7x:2x2x1
jax: 0.10.0
libtpu: 0.0.40
codegen_flags: <defaults>
</compile_context>

<pallas_src>
import functools
import math

import jax
import jax.numpy as jnp
from jax import lax
from jax.experimental import pallas as pl
from jax.experimental.pallas import tpu as pltpu

NUM_BINS = 6
EPS = 1e-8  # F.cosine_similarity default eps (per-row-norm clamp)


def _graph_loss_kernel(a_lbl_ref, feat_ref, loss_ref, gram_acc, *, inv_bs2, bs):
    # a_lbl_ref: (bs, bs)     f32   label adjacency (same block every grid step)
    # feat_ref:  (bs, tile_d) bf16  feature chunk along the D (reduction) axis
    # loss_ref:  (1, 1)       f32   scalar MSE loss (SMEM)
    # gram_acc:  (bs, bs)     f32   VMEM accumulator for feat @ feat.T
    k = pl.program_id(0)

    @pl.when(k == 0)
    def _init():
        gram_acc[...] = jnp.zeros_like(gram_acc)

    feat = feat_ref[...]                                     # bf16 (bs, tile_d)
    # MXU: bf16 inputs, f32 accumulation.  Streamed loop is DMA + vmatmul only.
    gram_acc[...] += lax.dot_general(
        feat, feat, (((1,), (1,)), ((), ())),
        preferred_element_type=jnp.float32)

    @pl.when(k == pl.num_programs(0) - 1)
    def _finalize():
        gram = gram_acc[...]                                 # (bs, bs) f32
        # diag(gram) == per-row sum of squares (exact for bf16 products in f32).
        rows = lax.broadcasted_iota(jnp.int32, (bs, bs), 0)
        cols = lax.broadcasted_iota(jnp.int32, (bs, bs), 1)
        diag = jnp.where(rows == cols, gram, 0.0)
        sumsq_col = jnp.sum(diag, axis=-1, keepdims=True)    # (bs, 1) lane sum
        sumsq_row = jnp.sum(diag, axis=0, keepdims=True)     # (1, bs) sublane sum
        # Per-row norm clamp (PyTorch cosine_similarity eps); rsqrt -> EUP.
        invn_col = lax.rsqrt(jnp.maximum(sumsq_col, EPS * EPS))
        invn_row = lax.rsqrt(jnp.maximum(sumsq_row, EPS * EPS))
        # Fused: A_feat - A_lbl without materializing intermediates.
        diff = gram * invn_col * invn_row - a_lbl_ref[...]   # (bs, bs)
        # Staged reduction: lane sum then full sum; mean via precomputed 1/bs^2.
        row = jnp.sum(diff * diff, axis=-1, keepdims=True)   # (bs, 1)
        loss_ref[0, 0] = jnp.sum(row) * inv_bs2


def build_zg():
    """bin^z graph: zg[i] = clamp(cos(|ctrs - ctrs[i]|), 0, 1)."""
    z_bin_ctrs = jnp.arange(NUM_BINS, dtype=jnp.float32) * (math.pi / 2.0 / 5.0)
    diff = jnp.abs(z_bin_ctrs[:, None] - z_bin_ctrs[None, :])
    return jnp.clip(jnp.cos(diff), 0.0, 1.0).astype(jnp.float32)


def _pick_tile_d(d, bs, target_bytes=2 << 20):
    """Lane-aligned reduction-axis tile sized from a ~2 MiB per-chunk DMA budget."""
    d128 = ((d + 127) // 128) * 128
    tile = (target_bytes // (2 * bs)) // 128 * 128           # bf16 -> 2 B/elem
    return int(max(128, min(tile, d128)))


@jax.jit
def explicit_inter_class_graph_loss(batch_label, batch_feat, zg):
    bs, d = batch_feat.shape
    tile_d = _pick_tile_d(d, bs)
    d_padded = ((d + tile_d - 1) // tile_d) * tile_d
    grid_k = d_padded // tile_d

    # Feature-independent label adjacency: tiny gather, done as JAX glue.
    a_lbl = zg[batch_label][:, batch_label].astype(jnp.float32)          # (bs, bs)
    # bf16 features: half the HBM->VMEM bytes, native-rate MXU, f32 accumulation.
    feat_bf16 = batch_feat.astype(jnp.bfloat16)
    if d_padded != d:
        # Zero columns change neither the gram nor the row norms.
        feat_bf16 = jnp.pad(feat_bf16, ((0, 0), (0, d_padded - d)))

    # Scoped-VMEM budget: double-buffered feat chunk + gram_acc + A_lbl (x2),
    # +50% headroom, clamped so it is valid on v7x (64 MiB physical per TC).
    feat_chunk_bytes = bs * tile_d * 2
    budget = 2 * feat_chunk_bytes + bs * bs * 4 + 2 * bs * bs * 4
    vmem_limit = int(min(max(budget * 3 // 2, 32 * 1024 * 1024), 64 * 1024 * 1024))

    kernel = functools.partial(
        _graph_loss_kernel, inv_bs2=1.0 / float(bs * bs), bs=bs)

    loss = pl.pallas_call(
        kernel,
        out_shape=jax.ShapeDtypeStruct((1, 1), jnp.float32),
        grid_spec=pltpu.PrefetchScalarGridSpec(
            num_scalar_prefetch=0,
            grid=(grid_k,),
            in_specs=[
                pl.BlockSpec((bs, bs), lambda k: (0, 0)),        # A_lbl, resident
                pl.BlockSpec((bs, tile_d), lambda k: (0, k)),    # feat chunk over D
            ],
            out_specs=pl.BlockSpec(
                (1, 1), lambda k: (0, 0),
                memory_space=pltpu.MemorySpace.SMEM),
            scratch_shapes=[
                pltpu.VMEM((bs, bs), jnp.float32),   # gram accumulator
            ],
        ),
        compiler_params=pltpu.CompilerParams(
            dimension_semantics=("arbitrary",),      # D is a reduction axis
            vmem_limit_bytes=vmem_limit),
    )(a_lbl, feat_bf16)
    return loss[0, 0]


def reference_loss(batch_label, batch_feat, zg):
    a_lbl = zg[batch_label][:, batch_label]
    sumsq = jnp.sum(batch_feat * batch_feat, axis=-1, keepdims=True)
    invn = lax.rsqrt(jnp.maximum(sumsq, EPS * EPS))
    a_feat = (batch_feat @ batch_feat.T) * (invn * invn.T)
    return jnp.mean((a_feat - a_lbl) ** 2)


if __name__ == "__main__":
    key = jax.random.PRNGKey(0)
    k_lbl, k_feat = jax.random.split(key)

    bs, d = 8, 32
    batch_label = jax.random.randint(k_lbl, (bs,), 0, NUM_BINS, dtype=jnp.int32)
    batch_feat = jax.random.normal(k_feat, (bs, d), dtype=jnp.float32)

    zg = build_zg()

    loss = jax.block_until_ready(
        explicit_inter_class_graph_loss(batch_label, batch_feat, zg))

    # Reference at the kernel's working precision (bf16 features, f32 math).
    feat_bf16_as_f32 = batch_feat.astype(jnp.bfloat16).astype(jnp.float32)
    ref_bf16 = jax.block_until_ready(reference_loss(batch_label, feat_bf16_as_f32, zg))
    # Full-f32 reference of the original module (relaxed tol for bf16 inputs).
    ref_f32 = jax.block_until_ready(reference_loss(batch_label, batch_feat, zg))

    assert jnp.allclose(loss, ref_bf16, atol=1e-4, rtol=1e-4), (loss, ref_bf16)
    assert jnp.allclose(loss, ref_f32, atol=1e-2, rtol=1e-2), (loss, ref_f32)

    print("KERNEL_OK")
</pallas_src>

<mosaic_0001>
module attributes {stable_mosaic.version = 11 : i64} {
  func.func @_graph_loss_kernel(%arg0: i32, %arg1: memref<8x8xf32, #tpu.memory_space<vmem>>, %arg2: memref<8x128xbf16, #tpu.memory_space<vmem>>, %arg3: memref<1x1xf32, #tpu.memory_space<smem>>, %arg4: memref<8x8xf32, #tpu.memory_space<vmem>>) attributes {dimension_semantics = [#tpu.dimension_semantics<arbitrary>], iteration_bounds = array<i64: 1>, scalar_prefetch = 0 : i64, scratch_operands = 1 : i64, tpu.core_type = #tpu.core_type<tc>, window_params = [{pipeline_mode = #tpu.pipeline_mode<synchronous>, transform_indices = @transform_0, window_bounds = array<i64: 8, 8>}, {transform_indices = @transform_1, window_bounds = array<i64: 8, 128>}, {transform_indices = @transform_2, window_bounds = array<i64: 1, 1>}]} {
    %c0_i32 = arith.constant 0 : i32
    %0 = arith.cmpi eq, %arg0, %c0_i32 : i32
    %1 = arith.extui %0 : i1 to i32
    %c0_i32_0 = arith.constant 0 : i32
    %2 = arith.cmpi ne, %1, %c0_i32_0 : i32
    scf.if %2 {
      %cst_8 = arith.constant 0.000000e+00 : f32
      %11 = vector.broadcast %cst_8 : f32 to vector<8x8xf32>
      %c0_9 = arith.constant 0 : index
      %c0_10 = arith.constant 0 : index
      %12 = vector.load %arg4[%c0_9, %c0_10] : memref<8x8xf32, #tpu.memory_space<vmem>>, vector<8x8xf32>
      tpu.vector_store %arg4[%c0_9, %c0_10], %11 {strides = array<i32>} : memref<8x8xf32, #tpu.memory_space<vmem>>, vector<8x8xf32>,
    } else {
    }
    %c0 = arith.constant 0 : index
    %c0_1 = arith.constant 0 : index
    %3 = vector.load %arg2[%c0, %c0_1] : memref<8x128xbf16, #tpu.memory_space<vmem>>, vector<8x128xbf16>
    %c0_2 = arith.constant 0 : index
    %c0_3 = arith.constant 0 : index
    %4 = vector.load %arg4[%c0_2, %c0_3] : memref<8x8xf32, #tpu.memory_space<vmem>>, vector<8x8xf32>
    %cst = arith.constant dense<0.000000e+00> : vector<8x8xf32>
    %5 = tpu.matmul %3, %3, %cst {dimension_numbers = #tpu.dot_dimension_numbers<[1], [1], [0], [0], [0, 0, 1, 0], [], []>} : vector<8x128xbf16>, vector<8x128xbf16>, vector<8x8xf32> -> vector<8x8xf32>
    %6 = arith.addf %4, %5 : vector<8x8xf32>
    %c0_4 = arith.constant 0 : index
    %c0_5 = arith.constant 0 : index
    %7 = vector.load %arg4[%c0_4, %c0_5] : memref<8x8xf32, #tpu.memory_space<vmem>>, vector<8x8xf32>
    tpu.vector_store %arg4[%c0_4, %c0_5], %6 {strides = array<i32>} : memref<8x8xf32, #tpu.memory_space<vmem>>, vector<8x8xf32>,
    %c0_i32_6 = arith.constant 0 : i32
    %8 = arith.cmpi eq, %arg0, %c0_i32_6 : i32
    %9 = arith.extui %8 : i1 to i32
    %c0_i32_7 = arith.constant 0 : i32
    %10 = arith.cmpi ne, %9, %c0_i32_7 : i32
    scf.if %10 {
      %c0_8 = arith.constant 0 : index
      %c0_9 = arith.constant 0 : index
      %11 = vector.load %arg4[%c0_8, %c0_9] : memref<8x8xf32, #tpu.memory_space<vmem>>, vector<8x8xf32>
      %12 = tpu.iota {dimensions = array<i32: 0>} : vector<8x8xi32>
      %13 = tpu.iota {dimensions = array<i32: 1>} : vector<8x8xi32>
      %14 = arith.cmpi eq, %12, %13 : vector<8x8xi32>
      %cst_10 = arith.constant 0.000000e+00 : f32
      %15 = vector.broadcast %cst_10 : f32 to vector<8x8xf32>
      %16 = arith.select %14, %11, %15 : vector<8x8xi1>, vector<8x8xf32>
      %cst_11 = arith.constant dense<0.000000e+00> : vector<8xf32>
      %17 = vector.multi_reduction <add>, %16, %cst_11 [1] : vector<8x8xf32> to vector<8xf32>
      %18 = vector.shape_cast %17 : vector<8xf32> to vector<8x1xf32>
      %cst_12 = arith.constant dense<0.000000e+00> : vector<8xf32>
      %19 = vector.multi_reduction <add>, %16, %cst_12 [0] : vector<8x8xf32> to vector<8xf32>
      %20 = vector.shape_cast %19 : vector<8xf32> to vector<1x8xf32>
      %cst_13 = arith.constant 1.000000e-16 : f32
      %21 = vector.broadcast %cst_13 : f32 to vector<8x1xf32>
      %22 = arith.maximumf %18, %21 : vector<8x1xf32>
      %23 = math.rsqrt %22 : vector<8x1xf32>
      %cst_14 = arith.constant 1.000000e-16 : f32
      %24 = vector.broadcast %cst_14 : f32 to vector<1x8xf32>
      %25 = arith.maximumf %20, %24 : vector<1x8xf32>
      %26 = math.rsqrt %25 : vector<1x8xf32>
      %27 = vector.broadcast %23 : vector<8x1xf32> to vector<8x8xf32>
      %28 = arith.mulf %11, %27 : vector<8x8xf32>
      %29 = vector.broadcast %26 : vector<1x8xf32> to vector<8x8xf32>
      %30 = arith.mulf %28, %29 : vector<8x8xf32>
      %c0_15 = arith.constant 0 : index
      %c0_16 = arith.constant 0 : index
      %31 = vector.load %arg1[%c0_15, %c0_16] : memref<8x8xf32, #tpu.memory_space<vmem>>, vector<8x8xf32>
      %32 = arith.subf %30, %31 : vector<8x8xf32>
      %33 = arith.mulf %32, %32 : vector<8x8xf32>
      %cst_17 = arith.constant dense<0.000000e+00> : vector<8xf32>
      %34 = vector.multi_reduction <add>, %33, %cst_17 [1] : vector<8x8xf32> to vector<8xf32>
      %35 = vector.shape_cast %34 : vector<8xf32> to vector<8x1xf32>
      %36 = vector.shape_cast %35 : vector<8x1xf32> to vector<1x8x1xf32>
      %cst_18 = arith.constant dense<0.000000e+00> : vector<1xf32>
      %37 = vector.multi_reduction <add>, %36, %cst_18 [1, 2] : vector<1x8x1xf32> to vector<1xf32>
      %38 = vector.shape_cast %37 : vector<1xf32> to vector<1x1x1xf32>
      %39 = vector.extract %38[0, 0, 0] : f32 from vector<1x1x1xf32>
      %cst_19 = arith.constant 1.562500e-02 : f32
      %40 = arith.mulf %39, %cst_19 : f32
      %c0_20 = arith.constant 0 : index
      %c0_21 = arith.constant 0 : index
      %41 = memref.load %arg3[%c0_20, %c0_21] : memref<1x1xf32, #tpu.memory_space<smem>>
      memref.store %40, %arg3[%c0_20, %c0_21] : memref<1x1xf32, #tpu.memory_space<smem>>
    } else {
    }
    return
  }
  func.func @transform_0(%arg0: i32) -> (i32, i32) {
    %c0_i32 = arith.constant 0 : i32
    %c0_i32_0 = arith.constant 0 : i32
    %c0_i32_1 = arith.constant 0 : i32
    return %c0_i32, %c0_i32_0 : i32, i32
  }
  func.func @transform_1(%arg0: i32) -> (i32, i32) {
    %c0_i32 = arith.constant 0 : i32
    %c0_i32_0 = arith.constant 0 : i32
    return %c0_i32, %arg0 : i32, i32
  }
  func.func @transform_2(%arg0: i32) -> (i32, i32) {
    %c0_i32 = arith.constant 0 : i32
    %c0_i32_0 = arith.constant 0 : i32
    %c0_i32_1 = arith.constant 0 : i32
    return %c0_i32, %c0_i32_0 : i32, i32
  }
}

</mosaic_0001>

<llo_original>
// kernel: explicit_inter_class_graph_loss.1
$region0: #{explicit_inter_class_graph_loss.1}
  #allocation0 [shape = 'u32[]', space=smem, size = 0x4, offset = 0x4, fixed_abs, tag = 'smem constant byte address 0x4 - core index']
  #allocation1 [shape = 'u32[144,128]{1,0:T(1,128)}', space=vmem, size = 0x12000, scoped, tag = 'internal scratch']
  #allocation2 [shape = 'f32[8,8]{1,0:T(8,128)}', space=vmem, size = 0x1000, scoped, tag = 'scratch operand']
  %s0 = inlined_call_operand.vmem [shape: f32[8,8], index: 0, kind: input, shape index: {}]
  %s1 = inlined_call_operand.vmem [shape: bf16[8,128], index: 1, kind: input, shape index: {}]
  %s2 = inlined_call_operand.hbm [shape: f32[1,1], index: 2, kind: output, shape index: {}]
  %s3 = sld [smem:[#allocation0]]
  $region26: #{explicit_inter_class_graph_loss.1} parent=0
    _
  %s5 = ssub.s32 1, %s3
  %s6 = scalar_select 0, %s5, %s3
  $region1: #{explicit_inter_class_graph_loss.1} parent=0
    #allocation3 [shape = 'u8[512]{0}', space=smem, size = 0x200, scoped, tag = 'output window, operand 0, single buffered']
    #allocation4 [shape = 's32[1]{0}', space=sflag, size = 0x4, scoped, tag = 'scoped memory for explicit_inter_class_graph_loss.1']
    %7 = vsyncpa [#allocation4], 0
    // Predicated region
    $region2: #{explicit_inter_class_graph_loss.1} parent=1 // pred_check
      _
    $region3: #{explicit_inter_class_graph_loss.1} parent=1 // pred_check_branch
      %9 = sbr.rel (0) target = $region5
    $region4: #{explicit_inter_class_graph_loss.1} parent=1 // pred_region
      _
    $region5: #{explicit_inter_class_graph_loss.1} parent=1 // pred_fallthru
      _
    // Predicated region
    $region6: #{explicit_inter_class_graph_loss.1} parent=1 // pred_check
      _
    $region7: #{explicit_inter_class_graph_loss.1} parent=1 // pred_check_branch
      %11 = sbr.rel (0) target = $region9
    $region8: #{explicit_inter_class_graph_loss.1} parent=1 // pred_region
      _
    $region9: #{explicit_inter_class_graph_loss.1} parent=1 // pred_fallthru
      _
    %p13 = scmp.eq.s32.totalorder 0, 0
    // Predicated region
    $region10: #{explicit_inter_class_graph_loss.1} parent=1 // pred_check
      %p14 = pneg %p13
    $region11: #{explicit_inter_class_graph_loss.1} parent=1 // pred_check_branch
      %16 = sbr.rel (%p14) target = $region13
    $region12: #{explicit_inter_class_graph_loss.1} parent=1 // pred_region
      %vm17 = vcmask 64512
      %18 = vst.msk [vmem:[#allocation2] sm:$0xff] %vm17, 0.0
    $region13: #{explicit_inter_class_graph_loss.1} parent=1 // pred_fallthru
      _
    %v19 = vld [vmem:[%s1] sm:$0xf]
    %v20 = vld [vmem:[#allocation2] sm:$0xff]
    %21 = vmatprep.subr.bf16.mxu0 0
    %22 = vmatpush1.bf16.xpose.msra.mxu0 %v19
    %23 = vmatprep.subr.bf16.mxu0 0
    %24 = vmatpush1.bf16.xpose.msra.mxu0 0
    %25 = vmatprep.subr.bf16.mxu0 0
    %26 = vmatpush1.bf16.xpose.msra.mxu0 0
    %27 = vmatprep.subr.bf16.mxu0 0
    %28 = vmatpush1.bf16.xpose.msra.mxu0 0
    %29 = vmatprep.subr.bf16.mxu0 0
    %30 = vmatpush1.bf16.xpose.msra.mxu0 0
    %31 = vmatprep.subr.bf16.mxu0 0
    %32 = vmatpush1.bf16.xpose.msra.mxu0 0
    %33 = vmatprep.subr.bf16.mxu0 0
    %34 = vmatpush1.bf16.xpose.msra.mxu0 0
    %35 = vmatprep.subr.bf16.mxu0 0
    %36 = vmatpush1.bf16.xpose.msra.mxu0 0
    %37 = vmatprep.subr.bf16.mxu0 0
    %38 = vmatpush1.bf16.xpose.msra.mxu0 0
    %39 = vmatprep.subr.bf16.mxu0 0
    %40 = vmatpush1.bf16.xpose.msra.mxu0 0
    %41 = vmatprep.subr.bf16.mxu0 0
    %42 = vmatpush1.bf16.xpose.msra.mxu0 0
    %43 = vmatprep.subr.bf16.mxu0 0
    %44 = vmatpush1.bf16.xpose.msra.mxu0 0
    %45 = vmatprep.subr.bf16.mxu0 0
    %46 = vmatpush1.bf16.xpose.msra.mxu0 0
    %47 = vmatprep.subr.bf16.mxu0 0
    %48 = vmatpush1.bf16.xpose.msra.mxu0 0
    %49 = vmatprep.subr.bf16.mxu0 0
    %50 = vmatpush1.bf16.xpose.msra.mxu0 0
    %51 = vmatprep.subr.bf16.mxu0 0
    %52 = vmatpush1.bf16.xpose.msra.mxu0 0
    %53 = vmatprep.mubr.bf16.mxu0 0
    %54 = vmatmul.mubr.bf16.gmra.mrb[0].mxu0 %v19
    %v55 = vpop.f32.mrb[0].mxu0
    %v56 = vadd.f32 0.0, %v55
    %v57 = vpop.f32.mrb[0].mxu0
    %v58 = vpop.f32.mrb[0].mxu0
    %v59 = vpop.f32.mrb[0].mxu0
    %60 = vdwg.mxu0
    %v61 = vadd.f32 %v20, %v56
    %vm62 = vcmask 64512
    %63 = vst.msk [vmem:[#allocation2] sm:$0xff] %vm62, %v61
    // Predicated region
    $region14: #{explicit_inter_class_graph_loss.1} parent=1 // pred_check
      %p64 = pneg %p13
    $region15: #{explicit_inter_class_graph_loss.1} parent=1 // pred_check_branch
      %66 = sbr.rel (%p64) target = $region17
    $region16: #{explicit_inter_class_graph_loss.1} parent=1 // pred_region
      %v67 = vld [vmem:[#allocation2] sm:$0xff]
      %v68 = vlaneseq
      %v69 = vshrl.u32 %v68, 7
      %v70 = vlaneseq
      %v71 = vand.u32 %v70, 127
      %vm72 = vcmp.eq.s32.totalorder %v69, %v71
      %v73 = vsel %vm72, %v67, 0.0
      %v74 = vsel %vm62, %v73, 0.0
      %75 = vadd.xlane.f32.xlu0 %v74
      %v76 = vpop.xlane.xlu0 %75
      %v77 = vrot.slane %v74, 4
      %v78 = vadd.f32 %v74, %v77
      %v79 = vrot.slane %v78, 2
      %v80 = vadd.f32 %v78, %v79
      %v81 = vrot.slane %v80, 1
      %v82 = vadd.f32 %v80, %v81
      %v83 = vmax.f32 %v76, 1e-16
      %v84 = vrsqrt.pop %v83
      %v85 = vmax.f32 %v82, 1e-16
      %v86 = vrsqrt.pop %v85
      %v87 = vmul.f32 %v67, %v84
      %v88 = vmul.f32 %v87, %v86
      %v89 = vld [vmem:[%s0] sm:$0xff]
      %v90 = vsub.f32 %v88, %v89
      %v91 = vmul.f32 %v90, %v90
      %v92 = vsel %vm62, %v91, 0.0
      %93 = vadd.xlane.f32.xlu0 %v92
      %v94 = vpop.xlane.xlu0 %93
      %vm95 = vcmask 7168
      %v96 = vsel %vm95, %v94, 0.0
      %97 = vadd.xlane.f32.xlu0 %v96
      %v98 = vpop.xlane.xlu0 %97
      %v99 = vrot.slane %v98, 4
      %v100 = vadd.f32 %v98, %v99
      %v101 = vrot.slane %v100, 2
      %v102 = vadd.f32 %v100, %v101
      %v103 = vrot.slane %v102, 1
      %v104 = vadd.f32 %v102, %v103
      %s105 = vtos %v104
      %s106 = smul.f32 %s105, 0.015625
      %s107 = scalar_lea.smem [#allocation3], 0
      %108 = sst [smem:[%s107]] %s106
    $region17: #{explicit_inter_class_graph_loss.1} parent=1 // pred_fallthru
      _
    // Predicated region
    $region18: #{explicit_inter_class_graph_loss.1} parent=1 // pred_check
      _
    $region19: #{explicit_inter_class_graph_loss.1} parent=1 // pred_check_branch
      %110 = sbr.rel (0) target = $region21
    $region20: #{explicit_inter_class_graph_loss.1} parent=1 // pred_region
      %s112 = ssub.s32 16, 16
      %113 = vsyncadd [#allocation4], %s112
      %116 = dma.smem_to_hbm [#allocation3], 16, %s2, [#allocation4]
    $region21: #{explicit_inter_class_graph_loss.1} parent=1 // pred_fallthru
      _
    // Predicated region
    $region22: #{explicit_inter_class_graph_loss.1} parent=1 // pred_check
      _
    $region23: #{explicit_inter_class_graph_loss.1} parent=1 // pred_check_branch
      %118 = sbr.rel (0) target = $region25
    $region24: #{explicit_inter_class_graph_loss.1} parent=1 // pred_region
      %119 = dma.done [#allocation4], 16
    $region25: #{explicit_inter_class_graph_loss.1} parent=1 // pred_fallthru
      _
    %120 = sfence
    %121 = vsyncpa [#allocation4], 1

</llo_original>
